<compile_context>
chip_gen: v6e
topology: v6e:2x2x1
jax: 0.10.0
libtpu: 0.0.40
codegen_flags: <defaults>
</compile_context>

<pallas_src>
import jax
import jax.numpy as jnp
from jax.experimental import pallas as pl
from jax.experimental.pallas import tpu as pltpu

LN_EPS = 1e-5  # PyTorch nn.LayerNorm default


# ----------------------------- kernel ---------------------------------------


def adapter_kernel(x_ref, wd_ref, bd_ref, wu_ref, bu_ref, o_ref):
    # x_ref: (tile_rows, in_dim) tile of flattened tokens.
    xf = x_ref[...].astype(jnp.float32)
    d = xf.shape[-1]

    # ---- LayerNorm statistics (fused one-pass moments, f32, clamped var) ----
    s1 = jnp.sum(xf, axis=-1, keepdims=True)
    s2 = jnp.sum(xf * xf, axis=-1, keepdims=True)
    mean = s1 * (1.0 / d)
    var = jnp.maximum(s2 * (1.0 / d) - mean * mean, 0.0)
    xn = (xf - mean) * jax.lax.rsqrt(var + LN_EPS)
    # (gamma/beta are pre-folded into wd_ref / bd_ref at prepare time.)

    # ---- down_proj: (tm, D) @ (D, Bp), MXU in weight dtype, f32 accumulate ----
    h = jnp.dot(xn.astype(wd_ref.dtype), wd_ref[...],
                preferred_element_type=jnp.float32)
    h = jnp.maximum(h + bd_ref[...], 0.0)          # f32 bias + ReLU

    # ---- up_proj: (tm, Bp) @ (Bp, D) ----
    y = jnp.dot(h.astype(wu_ref.dtype), wu_ref[...],
                preferred_element_type=jnp.float32)
    y = y + bu_ref[...]

    o_ref[...] = y.astype(o_ref.dtype)


# ----------------------------- helpers ---------------------------------------


def _round_up(x, m):
    return (x + m - 1) // m * m


def _cdiv(a, b):
    return -(-a // b)


def _probe_pipeline_mode():
    """Narrow, build-time capability check for BlockSpec(pipeline_mode=...)."""
    try:
        pl.BlockSpec((8, 128), lambda i: (0, 0), pipeline_mode=pl.Buffered(1))
        return True
    except (TypeError, AttributeError):
        return False


_HAS_PIPELINE_MODE = _probe_pipeline_mode()


def _vmem_capacity_bytes():
    """Per-TensorCore VMEM capacity; conservative 64 MiB fallback (v7x-class)."""
    try:
        info = pltpu.get_tpu_info()
        cap = getattr(info, "vmem_capacity_bytes", None)
        if cap:
            return int(cap)
    except Exception:
        pass
    return 64 << 20


def _choose_tile_rows(n_rows, in_dim, bottle_pad, x_itemsize, w_itemsize,
                      weight_copies, x_buffers, budget, min_steps, row_align):
    """Largest row tile that fits the VMEM budget, aligned to the packed
    sublane size, capped at 512, with at least `min_steps` grid steps."""
    weight_bytes = weight_copies * 2 * in_dim * bottle_pad * w_itemsize
    vec_bytes = weight_copies * 4 * (in_dim + bottle_pad)           # f32 biases
    avail = max(budget - weight_bytes - vec_bytes, 2 << 20)
    # Per row: x tile (x_buffers) + out tile (2 buffers) + ~12 B/elem f32 temps
    # (xf/xn and intermediates) + the (bottle_pad,) f32 hidden row.
    per_row = in_dim * ((x_buffers + 2) * x_itemsize + 12) + 4 * bottle_pad
    tile = avail // per_row
    tile = max(row_align, min(512, (tile // row_align) * row_align))
    # Keep >= min_steps grid steps so each TensorCore gets pipelined work.
    steps_cap = _round_up(max(_cdiv(n_rows, min_steps), 1), row_align)
    return int(min(tile, max(row_align, steps_cap)))


# ----------------------------- param prep ------------------------------------


def prepare_adapter_params(ln_w, ln_b, w_down, b_down, w_up, b_up, *,
                           lane=128, compute_dtype=jnp.bfloat16):
    """One-time (outside the forward) transform of PyTorch-convention weights.

    * Folds LayerNorm gamma/beta into the down projection:
        W'_d^T = diag(gamma) @ W_d^T,  b'_d = beta @ W_d^T + b_d
    * Transposes both weights for row-major (tokens, features) matmuls.
    * Zero-pads bottle_dim to a multiple of `lane` (128) -- padded columns stay
      exactly zero through bias+ReLU and the zero-padded up rows.
    * Stores weight matrices in `compute_dtype` (bf16 by default -> full MXU
      rate, half the HBM/VMEM); biases stay f32.
    """
    ln_w = jnp.asarray(ln_w, jnp.float32)
    ln_b = jnp.asarray(ln_b, jnp.float32)
    w_down = jnp.asarray(w_down, jnp.float32)       # (bottle, in_dim)
    b_down = jnp.asarray(b_down, jnp.float32)
    w_up = jnp.asarray(w_up, jnp.float32)           # (in_dim, bottle)
    b_up = jnp.asarray(b_up, jnp.float32)

    bottle, in_dim = w_down.shape
    bottle_pad = _round_up(bottle, lane)

    wd_t = w_down.T * ln_w[:, None]                  # (in_dim, bottle), gamma folded
    bd = ln_b @ w_down.T + b_down                    # (bottle,), beta folded
    wu_t = w_up.T                                    # (bottle, in_dim)

    if bottle_pad != bottle:
        pad = bottle_pad - bottle
        wd_t = jnp.pad(wd_t, ((0, 0), (0, pad)))
        wu_t = jnp.pad(wu_t, ((0, pad), (0, 0)))
        bd = jnp.pad(bd, (0, pad))

    return dict(
        wd_t=wd_t.astype(compute_dtype),
        bd=bd.reshape(1, bottle_pad),                # f32
        wu_t=wu_t.astype(compute_dtype),
        bu=b_up.reshape(1, in_dim),                  # f32
        in_dim=in_dim,
        bottle_pad=bottle_pad,
    )


# ----------------------------- pallas_call builder ----------------------------


def _build_adapter_call(n_pad, in_dim, bottle_pad, tile_rows, out_dtype,
                        x_itemsize, w_itemsize, vmem_limit, x_buffers,
                        single_buffer_weights):
    w_kwargs = {}
    if single_buffer_weights:
        # Constant index_map -> a single resident copy suffices.
        w_kwargs = dict(pipeline_mode=pl.Buffered(1))
    x_kwargs = {}
    if x_buffers != 2 and _HAS_PIPELINE_MODE:
        x_kwargs = dict(pipeline_mode=pl.Buffered(x_buffers))

    def const2d(r, c):
        return pl.BlockSpec((r, c), lambda i: (0, 0), **w_kwargs)

    grid = (n_pad // tile_rows,)

    flops = 4 * n_pad * in_dim * bottle_pad                 # two matmuls
    transcendentals = n_pad                                 # rsqrt per row
    weight_bytes = 2 * in_dim * bottle_pad * w_itemsize + 4 * (in_dim + bottle_pad)
    bytes_accessed = 2 * n_pad * in_dim * x_itemsize + weight_bytes

    return pl.pallas_call(
        adapter_kernel,
        out_shape=jax.ShapeDtypeStruct((n_pad, in_dim), out_dtype),
        grid_spec=pltpu.PrefetchScalarGridSpec(
            num_scalar_prefetch=0,
            grid=grid,
            in_specs=[
                pl.BlockSpec((tile_rows, in_dim), lambda i: (i, 0), **x_kwargs),
                const2d(in_dim, bottle_pad),     # down weight^T (gamma folded)
                const2d(1, bottle_pad),          # down bias (beta folded, f32)
                const2d(bottle_pad, in_dim),     # up weight^T
                const2d(1, in_dim),              # up bias (f32)
            ],
            out_specs=pl.BlockSpec((tile_rows, in_dim), lambda i: (i, 0)),
        ),
        compiler_params=pltpu.CompilerParams(
            dimension_semantics=("parallel",),
            vmem_limit_bytes=int(vmem_limit),
        ),
        cost_estimate=pl.CostEstimate(
            flops=int(flops),
            transcendentals=int(transcendentals),
            bytes_accessed=int(bytes_accessed),
        ),
    )


# ----------------------------- forward ---------------------------------------


def adapter_forward(x, params, *, tile_rows=None):
    """x: [..., in_dim].  `params` from prepare_adapter_params."""
    orig_shape = x.shape
    in_dim = params["in_dim"]
    assert orig_shape[-1] == in_dim, "last dim of x must equal in_dim"
    bottle_pad = params["bottle_pad"]

    x2 = x.reshape(-1, in_dim)
    n_rows = x2.shape[0]
    x_itemsize = x2.dtype.itemsize
    w_itemsize = params["wd_t"].dtype.itemsize

    # Generation-aware VMEM budget (per TensorCore).
    cap = _vmem_capacity_bytes()
    if cap >= (100 << 20):                    # v5e / v6e: 128 MiB physical
        vmem_limit = 96 << 20
        min_steps = 2
    else:                                     # v7x-class: 64 MiB physical
        vmem_limit = min(48 << 20, max(cap - (8 << 20), 16 << 20))
        min_steps = 4                         # >=2 steps per TensorCore

    single_buffer_weights = _HAS_PIPELINE_MODE
    weight_copies = 1 if single_buffer_weights else 2
    # Extra input buffer on high-BW / low-VMEM chips with bf16 weights and large
    # in_dim: hides per-step DMA latency at the cost of one extra x tile.
    x_buffers = 3 if (cap < (100 << 20) and w_itemsize <= 2 and in_dim >= 1024
                      and _HAS_PIPELINE_MODE) else 2

    # Row alignment matches the packed sublane tile of the activation dtype.
    row_align = max(8, 32 // x_itemsize)      # 8 f32, 16 bf16, 32 int8/fp8

    if tile_rows is None:
        budget = vmem_limit - (4 << 20)       # headroom for compiler scratch
        tile_rows = _choose_tile_rows(n_rows, in_dim, bottle_pad, x_itemsize,
                                      w_itemsize, weight_copies, x_buffers,
                                      budget, min_steps, row_align)

    n_pad = _round_up(n_rows, tile_rows)
    if n_pad != n_rows:
        x2 = jnp.pad(x2, ((0, n_pad - n_rows), (0, 0)))

    call = _build_adapter_call(n_pad, in_dim, bottle_pad, tile_rows, x.dtype,
                               x_itemsize, w_itemsize, vmem_limit, x_buffers,
                               single_buffer_weights)
    out = call(x2, params["wd_t"], params["bd"], params["wu_t"], params["bu"])
    return out[:n_rows].reshape(orig_shape)


# ----------------------------- reference -------------------------------------


def adapter_reference(x, ln_w, ln_b, w_down, b_down, w_up, b_up):
    xf = x.astype(jnp.float32)
    mean = jnp.mean(xf, axis=-1, keepdims=True)
    var = jnp.mean((xf - mean) ** 2, axis=-1, keepdims=True)
    xn = (xf - mean) * jax.lax.rsqrt(var + LN_EPS) * ln_w + ln_b
    h = jnp.maximum(xn @ w_down.T + b_down, 0.0)
    return (h @ w_up.T + b_up).astype(x.dtype)


# ----------------------------- test ------------------------------------------


if __name__ == "__main__":
    key = jax.random.PRNGKey(0)
    batch, seq, in_dim, bottle_dim = 2, 8, 32, 8

    k_x, k_wd, k_wu, k_g, k_b = jax.random.split(key, 5)
    x = jax.random.normal(k_x, (batch, seq, in_dim), dtype=jnp.float32)

    # Parameters mirroring Adapter.__init__ (kaiming_normal_(a=sqrt(5)) on
    # down_proj, zeros elsewhere), plus non-trivial LN affine to exercise the
    # gamma/beta folding path.
    std = (2.0 / (1.0 + 5.0)) ** 0.5 / (in_dim ** 0.5)
    w_down = std * jax.random.normal(k_wd, (bottle_dim, in_dim), dtype=jnp.float32)
    b_down = jnp.zeros((bottle_dim,), jnp.float32)
    w_up_zero = jnp.zeros((in_dim, bottle_dim), jnp.float32)   # module init
    w_up_nz = 0.1 * jax.random.normal(k_wu, (in_dim, bottle_dim), dtype=jnp.float32)
    b_up = jnp.zeros((in_dim,), jnp.float32)
    ln_w = 1.0 + 0.1 * jax.random.normal(k_g, (in_dim,), dtype=jnp.float32)
    ln_b = 0.1 * jax.random.normal(k_b, (in_dim,), dtype=jnp.float32)

    # 1) Exact-parity check: f32 compute dtype, module-default (zero) up_proj.
    p0 = prepare_adapter_params(ln_w, ln_b, w_down, b_down, w_up_zero, b_up,
                                compute_dtype=jnp.float32)
    out0 = jax.block_until_ready(adapter_forward(x, p0))
    ref0 = adapter_reference(x, ln_w, ln_b, w_down, b_down, w_up_zero, b_up)
    assert out0.shape == x.shape
    assert jnp.allclose(out0, ref0, atol=1e-4, rtol=1e-4)

    # 2) Exact-parity check with non-zero up_proj (full kernel path), f32 weights.
    p1 = prepare_adapter_params(ln_w, ln_b, w_down, b_down, w_up_nz, b_up,
                                compute_dtype=jnp.float32)
    out1 = jax.block_until_ready(adapter_forward(x, p1))
    ref1 = adapter_reference(x, ln_w, ln_b, w_down, b_down, w_up_nz, b_up)
    assert jnp.allclose(out1, ref1, atol=1e-4, rtol=1e-4)

    # 3) Performance-default path: bf16 weights (looser tolerance vs f32 ref).
    p2 = prepare_adapter_params(ln_w, ln_b, w_down, b_down, w_up_nz, b_up)
    out2 = jax.block_until_ready(adapter_forward(x, p2))
    assert jnp.allclose(out2, ref1, atol=1e-2, rtol=2e-2)

    # 4) Ragged row count exercises the pad + grid path.
    x_odd = x[:, :5, :]   # 10 rows
    out3 = jax.block_until_ready(adapter_forward(x_odd, p1))
    ref3 = adapter_reference(x_odd, ln_w, ln_b, w_down, b_down, w_up_nz, b_up)
    assert jnp.allclose(out3, ref3, atol=1e-4, rtol=1e-4)

    print("KERNEL_OK")
</pallas_src>

<mosaic_0001>
module attributes {stable_mosaic.version = 11 : i64} {
  func.func @adapter_kernel(%arg0: i32, %arg1: memref<8x32xf32, #tpu.memory_space<vmem>>, %arg2: memref<32x128xf32, #tpu.memory_space<vmem>>, %arg3: memref<1x128xf32, #tpu.memory_space<vmem>>, %arg4: memref<128x32xf32, #tpu.memory_space<vmem>>, %arg5: memref<1x32xf32, #tpu.memory_space<vmem>>, %arg6: memref<8x32xf32, #tpu.memory_space<vmem>>) attributes {dimension_semantics = [#tpu.dimension_semantics<parallel>], iteration_bounds = array<i64: 2>, scalar_prefetch = 0 : i64, scratch_operands = 0 : i64, tpu.core_type = #tpu.core_type<tc>, window_params = [{transform_indices = @transform_0, window_bounds = array<i64: 8, 32>}, {pipeline_mode = #tpu.pipeline_mode<synchronous>, transform_indices = @transform_1, window_bounds = array<i64: 32, 128>}, {pipeline_mode = #tpu.pipeline_mode<synchronous>, transform_indices = @transform_2, window_bounds = array<i64: 1, 128>}, {pipeline_mode = #tpu.pipeline_mode<synchronous>, transform_indices = @transform_3, window_bounds = array<i64: 128, 32>}, {pipeline_mode = #tpu.pipeline_mode<synchronous>, transform_indices = @transform_4, window_bounds = array<i64: 1, 32>}, {transform_indices = @transform_5, window_bounds = array<i64: 8, 32>}]} {
    %c0 = arith.constant 0 : index
    %c0_0 = arith.constant 0 : index
    %0 = vector.load %arg1[%c0, %c0_0] : memref<8x32xf32, #tpu.memory_space<vmem>>, vector<8x32xf32>
    %cst = arith.constant dense<0.000000e+00> : vector<8xf32>
    %1 = vector.multi_reduction <add>, %0, %cst [1] : vector<8x32xf32> to vector<8xf32>
    %2 = vector.shape_cast %1 : vector<8xf32> to vector<8x1xf32>
    %3 = arith.mulf %0, %0 : vector<8x32xf32>
    %cst_1 = arith.constant dense<0.000000e+00> : vector<8xf32>
    %4 = vector.multi_reduction <add>, %3, %cst_1 [1] : vector<8x32xf32> to vector<8xf32>
    %5 = vector.shape_cast %4 : vector<8xf32> to vector<8x1xf32>
    %cst_2 = arith.constant 3.125000e-02 : f32
    %6 = vector.broadcast %cst_2 : f32 to vector<8x1xf32>
    %7 = arith.mulf %2, %6 : vector<8x1xf32>
    %cst_3 = arith.constant 3.125000e-02 : f32
    %8 = vector.broadcast %cst_3 : f32 to vector<8x1xf32>
    %9 = arith.mulf %5, %8 : vector<8x1xf32>
    %10 = arith.mulf %7, %7 : vector<8x1xf32>
    %11 = arith.subf %9, %10 : vector<8x1xf32>
    %cst_4 = arith.constant 0.000000e+00 : f32
    %12 = vector.broadcast %cst_4 : f32 to vector<8x1xf32>
    %13 = arith.maximumf %11, %12 : vector<8x1xf32>
    %14 = vector.broadcast %7 : vector<8x1xf32> to vector<8x32xf32>
    %15 = arith.subf %0, %14 : vector<8x32xf32>
    %cst_5 = arith.constant 9.99999974E-6 : f32
    %16 = vector.broadcast %cst_5 : f32 to vector<8x1xf32>
    %17 = arith.addf %13, %16 : vector<8x1xf32>
    %18 = math.rsqrt %17 : vector<8x1xf32>
    %19 = vector.broadcast %18 : vector<8x1xf32> to vector<8x32xf32>
    %20 = arith.mulf %15, %19 : vector<8x32xf32>
    %c0_6 = arith.constant 0 : index
    %c0_7 = arith.constant 0 : index
    %21 = vector.load %arg2[%c0_6, %c0_7] : memref<32x128xf32, #tpu.memory_space<vmem>>, vector<32x128xf32>
    %cst_8 = arith.constant dense<0.000000e+00> : vector<8x128xf32>
    %22 = tpu.matmul %20, %21, %cst_8 {dimension_numbers = #tpu.dot_dimension_numbers<[1], [0], [0], [1], [0, 0, 1, 1], [], []>} : vector<8x32xf32>, vector<32x128xf32>, vector<8x128xf32> -> vector<8x128xf32>
    %c0_9 = arith.constant 0 : index
    %c0_10 = arith.constant 0 : index
    %23 = vector.load %arg3[%c0_9, %c0_10] : memref<1x128xf32, #tpu.memory_space<vmem>>, vector<1x128xf32>
    %24 = vector.broadcast %23 : vector<1x128xf32> to vector<8x128xf32>
    %25 = arith.addf %22, %24 : vector<8x128xf32>
    %cst_11 = arith.constant 0.000000e+00 : f32
    %26 = vector.broadcast %cst_11 : f32 to vector<8x128xf32>
    %27 = arith.maximumf %25, %26 : vector<8x128xf32>
    %c0_12 = arith.constant 0 : index
    %c0_13 = arith.constant 0 : index
    %28 = vector.load %arg4[%c0_12, %c0_13] : memref<128x32xf32, #tpu.memory_space<vmem>>, vector<128x32xf32>
    %cst_14 = arith.constant dense<0.000000e+00> : vector<8x32xf32>
    %29 = tpu.matmul %27, %28, %cst_14 {dimension_numbers = #tpu.dot_dimension_numbers<[1], [0], [0], [1], [0, 0, 1, 1], [], []>} : vector<8x128xf32>, vector<128x32xf32>, vector<8x32xf32> -> vector<8x32xf32>
    %c0_15 = arith.constant 0 : index
    %c0_16 = arith.constant 0 : index
    %30 = vector.load %arg5[%c0_15, %c0_16] : memref<1x32xf32, #tpu.memory_space<vmem>>, vector<1x32xf32>
    %31 = vector.broadcast %30 : vector<1x32xf32> to vector<8x32xf32>
    %32 = arith.addf %29, %31 : vector<8x32xf32>
    %c0_17 = arith.constant 0 : index
    %c0_18 = arith.constant 0 : index
    %33 = vector.load %arg6[%c0_17, %c0_18] : memref<8x32xf32, #tpu.memory_space<vmem>>, vector<8x32xf32>
    tpu.vector_store %arg6[%c0_17, %c0_18], %32 {strides = array<i32>} : memref<8x32xf32, #tpu.memory_space<vmem>>, vector<8x32xf32>,
    return
  }
  func.func @transform_0(%arg0: i32) -> (i32, i32) {
    %c0_i32 = arith.constant 0 : i32
    %c0_i32_0 = arith.constant 0 : i32
    return %arg0, %c0_i32 : i32, i32
  }
  func.func @transform_1(%arg0: i32) -> (i32, i32) {
    %c0_i32 = arith.constant 0 : i32
    %c0_i32_0 = arith.constant 0 : i32
    %c0_i32_1 = arith.constant 0 : i32
    return %c0_i32, %c0_i32_0 : i32, i32
  }
  func.func @transform_2(%arg0: i32) -> (i32, i32) {
    %c0_i32 = arith.constant 0 : i32
    %c0_i32_0 = arith.constant 0 : i32
    %c0_i32_1 = arith.constant 0 : i32
    return %c0_i32, %c0_i32_0 : i32, i32
  }
  func.func @transform_3(%arg0: i32) -> (i32, i32) {
    %c0_i32 = arith.constant 0 : i32
    %c0_i32_0 = arith.constant 0 : i32
    %c0_i32_1 = arith.constant 0 : i32
    return %c0_i32, %c0_i32_0 : i32, i32
  }
  func.func @transform_4(%arg0: i32) -> (i32, i32) {
    %c0_i32 = arith.constant 0 : i32
    %c0_i32_0 = arith.constant 0 : i32
    %c0_i32_1 = arith.constant 0 : i32
    return %c0_i32, %c0_i32_0 : i32, i32
  }
  func.func @transform_5(%arg0: i32) -> (i32, i32) {
    %c0_i32 = arith.constant 0 : i32
    %c0_i32_0 = arith.constant 0 : i32
    return %arg0, %c0_i32 : i32, i32
  }
}

</mosaic_0001>

<llo_original>
// kernel: tpu_custom_call.1
$region0: #{tpu_custom_call.1}
  #allocation0 [shape = 'u32[]', space=smem, size = 0x4, offset = 0x4, fixed_abs, tag = 'smem constant byte address 0x4 - core index']
  #allocation1 [shape = 'u32[144,128]{1,0:T(1,128)}', space=vmem, size = 0x12000, scoped, tag = 'internal scratch']
  %s0 = inlined_call_operand.vmem [shape: f32[16,32], index: 0, kind: input, shape index: {}]
  %s1 = inlined_call_operand.vmem [shape: f32[32,128], index: 1, kind: input, shape index: {}]
  %s2 = inlined_call_operand.vmem [shape: f32[1,128], index: 2, kind: input, shape index: {}]
  %s3 = inlined_call_operand.vmem [shape: f32[128,32], index: 3, kind: input, shape index: {}]
  %s4 = inlined_call_operand.vmem [shape: f32[1,32], index: 4, kind: input, shape index: {}]
  %s5 = inlined_call_operand.hbm [shape: f32[16,32], index: 5, kind: output, shape index: {}]
  %s6 = sld [smem:[#allocation0]]
  $region53: #{tpu_custom_call.1} parent=0
    _
  %s8 = ssub.s32 1, %s6
  %s9 = scalar_select 0, %s8, %s6
  $region1: #{tpu_custom_call.1} parent=0
    #allocation2 [shape = 'u8[8192]{0}', space=vmem, size = 0x2000, scoped, tag = 'output window, operand 0']
    #allocation3 [shape = 's32[2]{0}', space=sflag, size = 0x8, scoped, tag = 'scoped memory for tpu_custom_call.1']
    %10 = vsyncpa [#allocation3], 0
    %s11 = scalar_lea.sflag [#allocation3], 1
    %12 = vsyncpa %s11, 0
    loop: start=0, step=1, limit=4
    $region2: #{tpu_custom_call.1} parent=1 // loop_pre_header
      _
    $region3: #{tpu_custom_call.1} parent=1 // loop_header
      %s14 = sphi 0, %s18
      %p15 = scmp.ge.s32.totalorder %s14, 4
      %s24 = sphi 0, %s26
      %s27 = sphi 0, %s24
      %s28 = sphi 0, %s27
      %s44 = sphi 0, %s28
      %s48 = sphi 0, %s48
      %s50 = sphi 0, %s48
      %s51 = sphi 0, %s50
      %s65 = sphi 0, %s51
      %s69 = sphi 0, %s69
      %s71 = sphi 0, %s69
      %s72 = sphi 0, %s71
      %s86 = sphi 0, %s72
      %s90 = sphi 0, %s90
      %s92 = sphi 0, %s90
      %s93 = sphi 0, %s92
      %s107 = sphi 0, %s93
      %s111 = sphi 0, %s111
      %s113 = sphi 0, %s111
      %s114 = sphi 0, %s113
      %s128 = sphi 0, %s114
      %s134 = sphi 0, %s136
      %s137 = sphi 0, %s134
      %s138 = sphi 0, %s137
      %s154 = sphi 0, %s138
    $region4: #{tpu_custom_call.1} parent=1 // loop_header_branch
      %17 = sbr.rel (%p15) target = $region8
    $region5: #{tpu_custom_call.1} parent=1 // loop_body
      %s19 = ssub.s32 %s14, 1
      %s20 = ssub.s32 %s14, 2
      %s21 = sadd.s32 %s14, 1
      %s22 = ssub.s32 %s14, %s21
      %p23 = scmp.eq.s32.totalorder %s22, 0
      %s25 = sadd.s32 %s24, 1
      %s26 = scalar_select %p23, %s24, %s25
      %p29 = pneg %p23
      %p30 = scmp.eq.s32.totalorder %s14, 1
      %p31 = por %p29, %p30
      %p32 = scmp.ne.s32.totalorder %s24, %s27
      %p33 = scmp.eq.s32.totalorder %s14, 0
      %p34 = por %p32, %p33
      %p35 = scmp.ne.s32.totalorder %s24, %s27
      %p36 = scmp.eq.s32.totalorder %s19, 1
      %p37 = por %p35, %p36
      %p38 = scmp.ne.s32.totalorder %s27, %s28
      %p39 = scmp.eq.s32.totalorder %s19, 0
      %p40 = por %p38, %p39
      %p41 = scmp.ne.s32.totalorder %s27, %s28
      %p42 = scmp.eq.s32.totalorder %s20, 1
      %p43 = por %p41, %p42
      %p45 = scmp.ne.s32.totalorder %s28, %s44
      %p46 = scmp.eq.s32.totalorder %s20, 0
      %p47 = por %p45, %p46
      %s49 = sadd.s32 %s48, 1
      %p52 = scmp.eq.s32.totalorder %s14, 1
      %p53 = scmp.ne.s32.totalorder %s48, %s50
      %p54 = scmp.eq.s32.totalorder %s14, 0
      %p55 = por %p53, %p54
      %p56 = scmp.ne.s32.totalorder %s48, %s50
      %p57 = scmp.eq.s32.totalorder %s19, 1
      %p58 = por %p56, %p57
      %p59 = scmp.ne.s32.totalorder %s50, %s51
      %p60 = scmp.eq.s32.totalorder %s19, 0
      %p61 = por %p59, %p60
      %p62 = scmp.ne.s32.totalorder %s50, %s51
      %p63 = scmp.eq.s32.totalorder %s20, 1
      %p64 = por %p62, %p63
      %p66 = scmp.ne.s32.totalorder %s51, %s65
      %p67 = scmp.eq.s32.totalorder %s20, 0
      %p68 = por %p66, %p67
      %s70 = sadd.s32 %s69, 1
      %p73 = scmp.eq.s32.totalorder %s14, 1
      %p74 = scmp.ne.s32.totalorder %s69, %s71
      %p75 = scmp.eq.s32.totalorder %s14, 0
      %p76 = por %p74, %p75
      %p77 = scmp.ne.s32.totalorder %s69, %s71
      %p78 = scmp.eq.s32.totalorder %s19, 1
      %p79 = por %p77, %p78
      %p80 = scmp.ne.s32.totalorder %s71, %s72
      %p81 = scmp.eq.s32.totalorder %s19, 0
      %p82 = por %p80, %p81
      %p83 = scmp.ne.s32.totalorder %s71, %s72
      %p84 = scmp.eq.s32.totalorder %s20, 1
      %p85 = por %p83, %p84
      %p87 = scmp.ne.s32.totalorder %s72, %s86
      %p88 = scmp.eq.s32.totalorder %s20, 0
      %p89 = por %p87, %p88
      %s91 = sadd.s32 %s90, 1
      %p94 = scmp.eq.s32.totalorder %s14, 1
      %p95 = scmp.ne.s32.totalorder %s90, %s92
      %p96 = scmp.eq.s32.totalorder %s14, 0
      %p97 = por %p95, %p96
      %p98 = scmp.ne.s32.totalorder %s90, %s92
      %p99 = scmp.eq.s32.totalorder %s19, 1
      %p100 = por %p98, %p99
      %p101 = scmp.ne.s32.totalorder %s92, %s93
      %p102 = scmp.eq.s32.totalorder %s19, 0
      %p103 = por %p101, %p102
      %p104 = scmp.ne.s32.totalorder %s92, %s93
      %p105 = scmp.eq.s32.totalorder %s20, 1
      %p106 = por %p104, %p105
      %p108 = scmp.ne.s32.totalorder %s93, %s107
      %p109 = scmp.eq.s32.totalorder %s20, 0
      %p110 = por %p108, %p109
      %s112 = sadd.s32 %s111, 1
      %p115 = scmp.eq.s32.totalorder %s14, 1
      %p116 = scmp.ne.s32.totalorder %s111, %s113
      %p117 = scmp.eq.s32.totalorder %s14, 0
      %p118 = por %p116, %p117
      %p119 = scmp.ne.s32.totalorder %s111, %s113
      %p120 = scmp.eq.s32.totalorder %s19, 1
      %p121 = por %p119, %p120
      %p122 = scmp.ne.s32.totalorder %s113, %s114
      %p123 = scmp.eq.s32.totalorder %s19, 0
      %p124 = por %p122, %p123
      %p125 = scmp.ne.s32.totalorder %s113, %s114
      %p126 = scmp.eq.s32.totalorder %s20, 1
      %p127 = por %p125, %p126
      %p129 = scmp.ne.s32.totalorder %s114, %s128
      %p130 = scmp.eq.s32.totalorder %s20, 0
      %p131 = por %p129, %p130
      %s132 = ssub.s32 %s14, %s21
      %p133 = scmp.eq.s32.totalorder %s132, 0
      %s135 = sadd.s32 %s134, 1
      %s136 = scalar_select %p133, %s134, %s135
      %p139 = pneg %p133
      %p140 = scmp.eq.s32.totalorder %s14, 1
      %p141 = por %p139, %p140
      %p142 = scmp.ne.s32.totalorder %s134, %s137
      %p143 = scmp.eq.s32.totalorder %s14, 0
      %p144 = por %p142, %p143
      %p145 = scmp.ne.s32.totalorder %s134, %s137
      %p146 = scmp.eq.s32.totalorder %s19, 1
      %p147 = por %p145, %p146
      %p148 = scmp.ne.s32.totalorder %s137, %s138
      %p149 = scmp.eq.s32.totalorder %s19, 0
      %p150 = por %p148, %p149
      %p151 = scmp.ne.s32.totalorder %s137, %s138
      %p152 = scmp.eq.s32.totalorder %s20, 1
      %p153 = por %p151, %p152
      %p155 = scmp.ne.s32.totalorder %s138, %s154
      %p156 = scmp.eq.s32.totalorder %s20, 0
      %p157 = por %p155, %p156
      %p158 = scmp.le.s32.totalorder 1, %s14
      %p159 = scmp.lt.s32.totalorder %s14, 3
      %p160 = pnand %p158, %p159
      %p161 = pneg %p160
      // Predicated region
      $region9: #{tpu_custom_call.1} parent=5 // pred_check
        _
      $region10: #{tpu_custom_call.1} parent=5 // pred_check_branch
        %163 = sbr.rel (%p160) target = $region12
      $region11: #{tpu_custom_call.1} parent=5 // pred_region
        %s164 = ssub.s32 %s14, 1
        // Predicated region
        $region13: #{tpu_custom_call.1} parent=11 // pred_check
          %p165 = pneg %p61
        $region14: #{tpu_custom_call.1} parent=11 // pred_check_branch
          %167 = sbr.rel (%p165) target = $region16
        $region15: #{tpu_custom_call.1} parent=11 // pred_region
          _
        $region16: #{tpu_custom_call.1} parent=11 // pred_fallthru
          _
        // Predicated region
        $region17: #{tpu_custom_call.1} parent=11 // pred_check
          %p168 = pneg %p82
        $region18: #{tpu_custom_call.1} parent=11 // pred_check_branch
          %170 = sbr.rel (%p168) target = $region20
        $region19: #{tpu_custom_call.1} parent=11 // pred_region
          _
        $region20: #{tpu_custom_call.1} parent=11 // pred_fallthru
          _
        // Predicated region
        $region21: #{tpu_custom_call.1} parent=11 // pred_check
          %p171 = pneg %p103
        $region22: #{tpu_custom_call.1} parent=11 // pred_check_branch
          %173 = sbr.rel (%p171) target = $region24
        $region23: #{tpu_custom_call.1} parent=11 // pred_region
          _
        $region24: #{tpu_custom_call.1} parent=11 // pred_fallthru
          _
        // Predicated region
        $region25: #{tpu_custom_call.1} parent=11 // pred_check
          %p174 = pneg %p124
        $region26: #{tpu_custom_call.1} parent=11 // pred_check_branch
          %176 = sbr.rel (%p174) target = $region28
        $region27: #{tpu_custom_call.1} parent=11 // pred_region
          _
        $region28: #{tpu_custom_call.1} parent=11 // pred_fallthru
          _
      $region12: #{tpu_custom_call.1} parent=5 // pred_fallthru
        _
      %p177 = scmp.lt.s32.totalorder %s14, 2
      // Predicated region
      $region29: #{tpu_custom_call.1} parent=5 // pred_check
        %p178 = pneg %p177
      $region30: #{tpu_custom_call.1} parent=5 // pred_check_branch
        %180 = sbr.rel (%p178) target = $region32
      $region31: #{tpu_custom_call.1} parent=5 // pred_region
        // Predicated region
        $region33: #{tpu_custom_call.1} parent=31 // pred_check
          %p181 = pneg %p34
        $region34: #{tpu_custom_call.1} parent=31 // pred_check_branch
          %183 = sbr.rel (%p181) target = $region36
        $region35: #{tpu_custom_call.1} parent=31 // pred_region
          %p184 = scmp.lt.s32.totalorder %s14, 1
          %s185 = scalar_select %p184, %s14, 1
          %s186 = smul.addr %s185, 8
          %s187 = scalar_lea.vmem %s0, %s186
        $region36: #{tpu_custom_call.1} parent=31 // pred_fallthru
          _
      $region32: #{tpu_custom_call.1} parent=5 // pred_fallthru
        _
      %p188 = scmp.le.s32.totalorder 1, %s14
      %p189 = scmp.lt.s32.totalorder %s14, 3
      %p190 = pnand %p188, %p189
      %p191 = pneg %p190
      // Predicated region
      $region37: #{tpu_custom_call.1} parent=5 // pred_check
        _
      $region38: #{tpu_custom_call.1} parent=5 // pred_check_branch
        %193 = sbr.rel (%p190) target = $region40
      $region39: #{tpu_custom_call.1} parent=5 // pred_region
        %s194 = ssub.s32 %s14, 1
        %p195 = scmp.lt.s32.totalorder %s19, 1
        %s196 = scalar_select %p195, %s19, 1
        %s197 = smul.addr %s196, 8
        %s198 = scalar_lea.vmem %s0, %s197
        %p199 = pneg %p40
        %p200 = pneg %p37
        %p201 = pneg %p61
        %p202 = pneg %p58
        %p203 = pneg %p82
        %p204 = pneg %p79
        %p205 = pneg %p103
        %p206 = pneg %p100
        %p207 = pneg %p124
        %p208 = pneg %p121
        %p209 = pneg %p150
        %p210 = pneg %p147
        %s211 = sand.u32 %s137, 1
        %s212 = scalar_lea.sflag [#allocation3], %s211
        %s213 = sand.u32 %s137, 1
        %s214 = smul.addr %s213, 8
        %s215 = scalar_lea.vmem [#allocation2], %s214
        %p216 = scmp.lt.s32.totalorder %s19, 1
        %s217 = scalar_select %p216, %s19, 1
        %s218 = smul.addr %s217, 8
        %s219 = scalar_lea.vmem %s0, %s218
        %v220 = vld [vmem:[%s219] sm:$0xff]
        %vm221 = vcmask 261120
        %v222 = vsel %vm221, %v220, 0.0
        %223 = vadd.xlane.f32.xlu0 %v222
        %v224 = vpop.xlane.xlu0 %223
        %v225 = vmul.f32 %v220, %v220
        %v226 = vsel %vm221, %v225, 0.0
        %227 = vadd.xlane.f32.xlu0 %v226
        %v228 = vpop.xlane.xlu0 %227
        %v229 = vmul.f32 %v224, 0.03125
        %v230 = vmul.f32 %v228, 0.03125
        %v231 = vmul.f32 %v229, %v229
        %v232 = vsub.f32 %v230, %v231
        %v233 = vmax.f32 %v232, 0.0
        %v234 = vsub.f32 %v220, %v229
        %v235 = vadd.f32 %v233, 1e-05
        %v236 = vrsqrt.pop %v235
        %v237 = vmul.f32 %v234, %v236
        %v238 = vld [vmem:[%s1] sm:$0xff]
        %v239 = vld [vmem:[%s1 + $0x8] sm:$0xff]
        %v240 = vld [vmem:[%s1 + $0x10] sm:$0xff]
        %v241 = vld [vmem:[%s1 + $0x18] sm:$0xff]
        %v242 = vld [vmem:[%s2] sm:$0x1]
        %v244 = vlaneseq
        %v245 = vshrl.u32 %v244, 7
        %v246 = vsub.s32 0, %v245
        %v247 = vrot.slane %v242, %v246
        %v250 = vsel %vm221, %v237, 0
        %252 = vmatprep.subr.mxu0 0.0
        %253 = vmatpush1.msra.mxu0 0.0
        %254 = vmatprep.subr.mxu0 0.0
        %255 = vmatpush1.msra.mxu0 0.0
        %256 = vmatprep.subr.mxu0 0.0
        %257 = vmatpush1.msra.mxu0 0.0
        %258 = vmatprep.subr.mxu0 0.0
        %259 = vmatpush1.msra.mxu0 0.0
        %260 = vmatprep.subr.mxu0 0.0
        %261 = vmatpush1.msra.mxu0 0.0
        %262 = vmatprep.subr.mxu0 0.0
        %263 = vmatpush1.msra.mxu0 0.0
        %264 = vmatprep.subr.mxu0 0.0
        %265 = vmatpush1.msra.mxu0 0.0
        %266 = vmatprep.subr.mxu0 0.0
        %267 = vmatpush1.msra.mxu0 0.0
        %268 = vmatprep.subr.mxu0 0.0
        %269 = vmatpush1.msra.mxu0 0.0
        %270 = vmatprep.subr.mxu0 0.0
        %271 = vmatpush1.msra.mxu0 0.0
        %272 = vmatprep.subr.mxu0 0.0
        %273 = vmatpush1.msra.mxu0 0.0
        %274 = vmatprep.subr.mxu0 0.0
        %275 = vmatpush1.msra.mxu0 0.0
        %276 = vmatprep.subr.mxu0 0.0
        %277 = vmatpush1.msra.mxu0 %v241
        %278 = vmatprep.subr.mxu0 0.0
        %279 = vmatpush1.msra.mxu0 %v240
        %280 = vmatprep.subr.mxu0 0.0
        %281 = vmatpush1.msra.mxu0 %v239
        %282 = vmatprep.subr.mxu0 0.0
        %283 = vmatpush1.msra.mxu0 %v238
        %284 = vmatprep.subr.mxu0 0.0
        %285 = vmatpush2.msra.mxu0 0.0
        %286 = vmatprep.subr.mxu0 0.0
        %287 = vmatpush2.msra.mxu0 0.0
        %288 = vmatprep.subr.mxu0 0.0
        %289 = vmatpush2.msra.mxu0 0.0
        %290 = vmatprep.subr.mxu0 0.0
        %291 = vmatpush2.msra.mxu0 0.0
        %292 = vmatprep.subr.mxu0 0.0
        %293 = vmatpush2.msra.mxu0 0.0
        %294 = vmatprep.subr.mxu0 0.0
        %295 = vmatpush2.msra.mxu0 0.0
        %296 = vmatprep.subr.mxu0 0.0
        %297 = vmatpush2.msra.mxu0 0.0
        %298 = vmatprep.subr.mxu0 0.0
        %299 = vmatpush2.msra.mxu0 0.0
        %300 = vmatprep.subr.mxu0 0.0
        %301 = vmatpush2.msra.mxu0 0.0
        %302 = vmatprep.subr.mxu0 0.0
        %303 = vmatpush2.msra.mxu0 0.0
        %304 = vmatprep.subr.mxu0 0.0
        %305 = vmatpush2.msra.mxu0 0.0
        %306 = vmatprep.subr.mxu0 0.0
        %307 = vmatpush2.msra.mxu0 0.0
        %308 = vmatprep.subr.mxu0 0.0
        %309 = vmatpush2.msra.mxu0 0.0
        %310 = vmatprep.subr.mxu0 0.0
        %311 = vmatpush2.msra.mxu0 0.0
        %312 = vmatprep.subr.mxu0 0.0
        %313 = vmatpush2.msra.mxu0 0.0
        %314 = vmatprep.subr.mxu0 0.0
        %315 = vmatpush2.msra.mxu0 0.0
        %316 = vmatprep.mubr.f32.mxu0 0.0
        %317 = vmatmul.mubr.f32.gmra.mxu0 %v250
        %v318 = vpop.f32.mrf.mxu0
        %v319 = vadd.f32 %v247, %v318
        %v320 = vpop.f32.mrf.mxu0
        %321 = vdwg.mxu0
        %v322 = vmax.f32 %v319, 0.0
        %v323 = vld [vmem:[%s3] sm:$0xff]
        %v324 = vld [vmem:[%s3 + $0x8] sm:$0xff]
        %v325 = vld [vmem:[%s3 + $0x10] sm:$0xff]
        %v326 = vld [vmem:[%s3 + $0x18] sm:$0xff]
        %v327 = vld [vmem:[%s3 + $0x20] sm:$0xff]
        %v328 = vld [vmem:[%s3 + $0x28] sm:$0xff]
        %v329 = vld [vmem:[%s3 + $0x30] sm:$0xff]
        %v330 = vld [vmem:[%s3 + $0x38] sm:$0xff]
        %v331 = vld [vmem:[%s3 + $0x40] sm:$0xff]
        %v332 = vld [vmem:[%s3 + $0x48] sm:$0xff]
        %v333 = vld [vmem:[%s3 + $0x50] sm:$0xff]
        %v334 = vld [vmem:[%s3 + $0x58] sm:$0xff]
        %v335 = vld [vmem:[%s3 + $0x60] sm:$0xff]
        %v336 = vld [vmem:[%s3 + $0x68] sm:$0xff]
        %v337 = vld [vmem:[%s3 + $0x70] sm:$0xff]
        %v338 = vld [vmem:[%s3 + $0x78] sm:$0xff]
        %v339 = vld [vmem:[%s4] sm:$0x1]
        %v341 = vlaneseq
        %v342 = vshrl.u32 %v341, 7
        %v343 = vsub.s32 0, %v342
        %v344 = vrot.slane %v339, %v343
        %346 = vmatprep.subr.mxu0 0.0
        %347 = vmatpush1.msra.mxu0 %v338
        %348 = vmatprep.subr.mxu0 0.0
        %349 = vmatpush1.msra.mxu0 %v337
        %350 = vmatprep.subr.mxu0 0.0
        %351 = vmatpush1.msra.mxu0 %v336
        %352 = vmatprep.subr.mxu0 0.0
        %353 = vmatpush1.msra.mxu0 %v335
        %354 = vmatprep.subr.mxu0 0.0
        %355 = vmatpush1.msra.mxu0 %v334
        %356 = vmatprep.subr.mxu0 0.0
        %357 = vmatpush1.msra.mxu0 %v333
        %358 = vmatprep.subr.mxu0 0.0
        %359 = vmatpush1.msra.mxu0 %v332
        %360 = vmatprep.subr.mxu0 0.0
        %361 = vmatpush1.msra.mxu0 %v331
        %362 = vmatprep.subr.mxu0 0.0
        %363 = vmatpush1.msra.mxu0 %v330
        %364 = vmatprep.subr.mxu0 0.0
        %365 = vmatpush1.msra.mxu0 %v329
        %366 = vmatprep.subr.mxu0 0.0
        %367 = vmatpush1.msra.mxu0 %v328
        %368 = vmatprep.subr.mxu0 0.0
        %369 = vmatpush1.msra.mxu0 %v327
        %370 = vmatprep.subr.mxu0 0.0
        %371 = vmatpush1.msra.mxu0 %v326
        %372 = vmatprep.subr.mxu0 0.0
        %373 = vmatpush1.msra.mxu0 %v325
        %374 = vmatprep.subr.mxu0 0.0
        %375 = vmatpush1.msra.mxu0 %v324
        %376 = vmatprep.subr.mxu0 0.0
        %377 = vmatpush1.msra.mxu0 %v323
        %378 = vmatprep.subr.mxu0 0.0
        %379 = vmatpush2.msra.mxu0 0.0
        %380 = vmatprep.subr.mxu0 0.0
        %381 = vmatpush2.msra.mxu0 0.0
        %382 = vmatprep.subr.mxu0 0.0
        %383 = vmatpush2.msra.mxu0 0.0
        %384 = vmatprep.subr.mxu0 0.0
        %385 = vmatpush2.msra.mxu0 0.0
        %386 = vmatprep.subr.mxu0 0.0
        %387 = vmatpush2.msra.mxu0 0.0
        %388 = vmatprep.subr.mxu0 0.0
        %389 = vmatpush2.msra.mxu0 0.0
        %390 = vmatprep.subr.mxu0 0.0
        %391 = vmatpush2.msra.mxu0 0.0
        %392 = vmatprep.subr.mxu0 0.0
        %393 = vmatpush2.msra.mxu0 0.0
        %394 = vmatprep.subr.mxu0 0.0
        %395 = vmatpush2.msra.mxu0 0.0
        %396 = vmatprep.subr.mxu0 0.0
        %397 = vmatpush2.msra.mxu0 0.0
        %398 = vmatprep.subr.mxu0 0.0
        %399 = vmatpush2.msra.mxu0 0.0
        %400 = vmatprep.subr.mxu0 0.0
        %401 = vmatpush2.msra.mxu0 0.0
        %402 = vmatprep.subr.mxu0 0.0
        %403 = vmatpush2.msra.mxu0 0.0
        %404 = vmatprep.subr.mxu0 0.0
        %405 = vmatpush2.msra.mxu0 0.0
        %406 = vmatprep.subr.mxu0 0.0
        %407 = vmatpush2.msra.mxu0 0.0
        %408 = vmatprep.subr.mxu0 0.0
        %409 = vmatpush2.msra.mxu0 0.0
        %410 = vmatprep.mubr.f32.mxu0 0.0
        %411 = vmatmul.mubr.f32.gmra.mxu0 %v322
        %v412 = vpop.f32.mrf.mxu0
        %v413 = vadd.f32 %v344, %v412
        %v414 = vpop.f32.mrf.mxu0
        %415 = vdwg.mxu0
        %416 = vst.msk [vmem:[%s215] sm:$0xff] %vm221, %v413
        %s417 = sand.u32 %s137, 1
        %s418 = scalar_lea.sflag [#allocation3], %s417
        %s419 = sand.u32 %s137, 1
        %s420 = smul.addr %s419, 8
        %s421 = scalar_lea.vmem [#allocation2], %s420
        // Predicated region
        $region41: #{tpu_custom_call.1} parent=39 // pred_check
          %p422 = pneg %p147
        $region42: #{tpu_custom_call.1} parent=39 // pred_check_branch
          %424 = sbr.rel (%p422) target = $region44
        $region43: #{tpu_custom_call.1} parent=39 // pred_region
          %s426 = ssub.s32 128, 128
          %427 = vsyncadd %s418, %s426
          %s428 = smul.addr %s19, 128
          %s429 = scalar_lea.hbm %s5, %s428
          %s431 = sshll.u32 %s421, 4
          %s432 = int_to_ptr.vmem [resolvable:$true] %s431
          %434 = dma.vmem_to_hbm [thread:$0]  %s432, 128, %s429, %s418
        $region44: #{tpu_custom_call.1} parent=39 // pred_fallthru
          _
      $region40: #{tpu_custom_call.1} parent=5 // pred_fallthru
        _
      %p435 = scmp.le.s32.totalorder 2, %s14
      // Predicated region
      $region45: #{tpu_custom_call.1} parent=5 // pred_check
        %p436 = pneg %p435
      $region46: #{tpu_custom_call.1} parent=5 // pred_check_branch
        %438 = sbr.rel (%p436) target = $region48
      $region47: #{tpu_custom_call.1} parent=5 // pred_region
        %s439 = ssub.s32 %s14, 2
        // Predicated region
        $region49: #{tpu_custom_call.1} parent=47 // pred_check
          %p440 = pneg %p153
        $region50: #{tpu_custom_call.1} parent=47 // pred_check_branch
          %442 = sbr.rel (%p440) target = $region52
        $region51: #{tpu_custom_call.1} parent=47 // pred_region
          %s443 = sand.u32 %s138, 1
          %s444 = scalar_lea.sflag [#allocation3], %s443
          %s445 = sand.u32 %s138, 1
          %s446 = smul.addr %s445, 8
          %s447 = scalar_lea.vmem [#allocation2], %s446
          %448 = dma.done %s444, 128
        $region52: #{tpu_custom_call.1} parent=47 // pred_fallthru
          _
      $region48: #{tpu_custom_call.1} parent=5 // pred_fallthru
        _
    $region6: #{tpu_custom_call.1} parent=1 // loop_footer
      %s18 = sadd.s32 1, %s14
    $region7: #{tpu_custom_call.1} parent=1 // loop_footer_branch
      %13 = sbr.rel target = $region3
    $region8: #{tpu_custom_call.1} parent=1 // loop_exit
      _
    %449 = vsyncpa [#allocation3], 1
    %s450 = scalar_lea.sflag [#allocation3], 1
    %451 = vsyncpa %s450, 1

</llo_original>
